<compile_context>
chip_gen: v7x
topology: tpu7x:2x2x1
jax: 0.10.0
libtpu: 0.0.40
codegen_flags: <defaults>
</compile_context>

<pallas_src>
import functools

import jax
import jax.numpy as jnp
from jax.experimental import pallas as pl
from jax.experimental.pallas import tpu as pltpu

HIDDEN = 60          # logical hidden width (PyTorch module)
HIDDEN_PAD = 128     # padded to one full lane tile
_ROW_ALIGN = 256     # row granularity for large batch tiles
_VMEM_LIMIT = 48 * 1024 * 1024   # explicit scoped-VMEM cap (covers v5e default)


def _round_up(n, m):
    return ((n + m - 1) // m) * m


def _mlp_kernel(x_ref,
                w1_ref, b1_ref,
                w2_ref, b2_ref,
                w3_ref, b3_ref,
                w4_ref, b4_ref,
                o_ref):
    # bf16 MXU operands, f32 accumulation / bias / ReLU.
    x = x_ref[...].astype(jnp.bfloat16)                        # (TM, F)

    h = jnp.dot(x, w1_ref[...], preferred_element_type=jnp.float32) + b1_ref[...]
    h = jnp.maximum(h, 0.0).astype(jnp.bfloat16)

    h = jnp.dot(h, w2_ref[...], preferred_element_type=jnp.float32) + b2_ref[...]
    h = jnp.maximum(h, 0.0).astype(jnp.bfloat16)

    h = jnp.dot(h, w3_ref[...], preferred_element_type=jnp.float32) + b3_ref[...]
    h = jnp.maximum(h, 0.0).astype(jnp.bfloat16)

    # Final (hidden -> 1) layer as (1,128) x (TM,128)^T on the MXU so the
    # result is lane-dense: (1, TM). Padded lanes of w4 are zero -> inert.
    z = jax.lax.dot_general(w4_ref[...], h, (((1,), (1,)), ((), ())),
                            preferred_element_type=jnp.float32) + b4_ref[...]
    o_ref[0] = jax.nn.sigmoid(z)                               # EUP, (1, TM) store


def _pick_tile(batch, cap):
    """Pick (TM, n_tiles) with n_tiles * TM >= batch.

    Small batches -> one tile rounded to a sublane multiple (no 256-padding).
    Large batches -> >=2 (even) tiles of at most `cap` rows, each a multiple of
    256, derived from the batch so padding waste stays < one tile.
    """
    bp = _round_up(batch, 8)
    if bp <= min(512, cap):
        return bp, 1
    n = max(2, pl.cdiv(bp, cap))
    if n % 2:
        n += 1                       # even tile count -> balanced v7x megacore
    tm = min(cap, _round_up(pl.cdiv(bp, n), _ROW_ALIGN))
    return tm, pl.cdiv(bp, tm)


@functools.partial(jax.jit, static_argnames=("max_tm",))
def custom_model3_forward(x, p, max_tm=8192):
    """x: (B, in_features) float32.  p: padded params from pad_params()."""
    B, F = x.shape

    # Cap the tile so the live set (double-buffered f32 x tile + a few
    # (TM,128) f32/bf16 activation buffers + lane-dense out) stays well inside
    # the 48 MiB scoped-VMEM limit on every generation.
    per_row_bytes = 8 * F + 2304
    cap = min(max_tm, (28 * 1024 * 1024) // per_row_bytes)
    cap = max(_ROW_ALIGN, (cap // _ROW_ALIGN) * _ROW_ALIGN)

    TM, n_tiles = _pick_tile(B, cap)
    Bp = TM * n_tiles
    if Bp != B:
        x = jnp.pad(x, ((0, Bp - B), (0, 0)))      # padded rows sliced off below

    resident2 = lambda i: (0, 0)                   # weights stay put across steps
    in_specs = [
        pl.BlockSpec((TM, F), lambda i: (i, 0)),               # x tile
        pl.BlockSpec((F, HIDDEN_PAD), resident2),              # w1 (bf16)
        pl.BlockSpec((1, HIDDEN_PAD), resident2),              # b1 (f32)
        pl.BlockSpec((HIDDEN_PAD, HIDDEN_PAD), resident2),     # w2 (bf16)
        pl.BlockSpec((1, HIDDEN_PAD), resident2),              # b2
        pl.BlockSpec((HIDDEN_PAD, HIDDEN_PAD), resident2),     # w3 (bf16)
        pl.BlockSpec((1, HIDDEN_PAD), resident2),              # b3
        pl.BlockSpec((1, HIDDEN_PAD), resident2),              # w4 row (bf16)
        pl.BlockSpec((1, 1), resident2),                       # b4
    ]
    # Lane-dense output: one contiguous (1, 1, TM) row per grid step.
    out_spec = pl.BlockSpec((1, 1, TM), lambda i: (i, 0, 0))

    out = pl.pallas_call(
        _mlp_kernel,
        out_shape=jax.ShapeDtypeStruct((n_tiles, 1, TM), jnp.float32),
        grid=(n_tiles,),
        in_specs=in_specs,
        out_specs=out_spec,
        compiler_params=pltpu.CompilerParams(
            dimension_semantics=("parallel",),     # megacore sharding on v7x
            vmem_limit_bytes=_VMEM_LIMIT,
        ),
    )(x, p["w1"], p["b1"], p["w2"], p["b2"], p["w3"], p["b3"],
      p["w4_row"], p["b4"])

    return out.reshape(Bp)[:B].reshape(B, 1)


def init_params(key, in_features):
    """PyTorch nn.Linear-style init: U(-1/sqrt(fan_in), +1/sqrt(fan_in)).
    Weights stored as (in_features, out_features) so forward is x @ W + b."""
    def linear(k, fan_in, fan_out):
        kw, kb = jax.random.split(k)
        bound = 1.0 / jnp.sqrt(jnp.float32(fan_in))
        w = jax.random.uniform(kw, (fan_in, fan_out), jnp.float32, -bound, bound)
        b = jax.random.uniform(kb, (fan_out,), jnp.float32, -bound, bound)
        return w, b

    k1, k2, k3, k4 = jax.random.split(key, 4)
    w1, b1 = linear(k1, in_features, HIDDEN)
    w2, b2 = linear(k2, HIDDEN, HIDDEN)
    w3, b3 = linear(k3, HIDDEN, HIDDEN)
    w4, b4 = linear(k4, HIDDEN, 1)
    return {"w1": w1, "b1": b1, "w2": w2, "b2": b2,
            "w3": w3, "b3": b3, "w4": w4, "b4": b4}


def pad_params(p):
    """Zero-pad the 60-wide hidden dim to 128 lanes; weights in bf16 (MXU
    operands), biases kept f32 (added to the f32 accumulator)."""
    hp = HIDDEN_PAD - HIDDEN
    return {
        "w1": jnp.pad(p["w1"], ((0, 0), (0, hp))).astype(jnp.bfloat16),
        "b1": jnp.pad(p["b1"], ((0, hp),)).reshape(1, HIDDEN_PAD),
        "w2": jnp.pad(p["w2"], ((0, hp), (0, hp))).astype(jnp.bfloat16),
        "b2": jnp.pad(p["b2"], ((0, hp),)).reshape(1, HIDDEN_PAD),
        "w3": jnp.pad(p["w3"], ((0, hp), (0, hp))).astype(jnp.bfloat16),
        "b3": jnp.pad(p["b3"], ((0, hp),)).reshape(1, HIDDEN_PAD),
        "w4_row": jnp.pad(p["w4"].reshape(HIDDEN), ((0, hp),))
                     .reshape(1, HIDDEN_PAD).astype(jnp.bfloat16),
        "b4": p["b4"].reshape(1, 1),
    }


def reference_forward(x, p):
    h = jnp.maximum(x @ p["w1"] + p["b1"], 0.0)
    h = jnp.maximum(h @ p["w2"] + p["b2"], 0.0)
    h = jnp.maximum(h @ p["w3"] + p["b3"], 0.0)
    z = jnp.dot(h, p["w4"], precision=jax.lax.Precision.HIGHEST) + p["b4"]
    return jax.nn.sigmoid(z)


if __name__ == "__main__":
    key = jax.random.PRNGKey(0)
    k_params, k_x1, k_x2 = jax.random.split(key, 3)

    in_features = 32
    params = init_params(k_params, in_features)
    kparams = pad_params(params)

    # Small batch (single grid step).
    x_small = jax.random.normal(k_x1, (8, in_features), jnp.float32)
    out_small = jax.block_until_ready(custom_model3_forward(x_small, kparams))
    ref_small = reference_forward(x_small, params)
    assert out_small.shape == (8, 1)
    assert jnp.allclose(out_small, ref_small, atol=2e-2, rtol=2e-2), "mismatch (small)"

    # Non-multiple batch with max_tm=256 to exercise the multi-tile grid
    # (2 even steps) + batch-padding + lane-dense output reshape path.
    x_big = jax.random.normal(k_x2, (300, in_features), jnp.float32)
    out_big = jax.block_until_ready(
        custom_model3_forward(x_big, kparams, max_tm=256))
    ref_big = reference_forward(x_big, params)
    assert out_big.shape == (300, 1)
    assert jnp.allclose(out_big, ref_big, atol=2e-2, rtol=2e-2), "mismatch (tiled)"

    print("KERNEL_OK")
</pallas_src>

<mosaic_0001>
module attributes {stable_mosaic.version = 11 : i64} {
  func.func @_mlp_kernel(%arg0: i32, %arg1: memref<8x32xf32, #tpu.memory_space<vmem>>, %arg2: memref<32x128xbf16, #tpu.memory_space<vmem>>, %arg3: memref<1x128xf32, #tpu.memory_space<vmem>>, %arg4: memref<128x128xbf16, #tpu.memory_space<vmem>>, %arg5: memref<1x128xf32, #tpu.memory_space<vmem>>, %arg6: memref<128x128xbf16, #tpu.memory_space<vmem>>, %arg7: memref<1x128xf32, #tpu.memory_space<vmem>>, %arg8: memref<1x128xbf16, #tpu.memory_space<vmem>>, %arg9: memref<1x1xf32, #tpu.memory_space<vmem>>, %arg10: memref<1x1x8xf32, #tpu.memory_space<vmem>>) attributes {dimension_semantics = [#tpu.dimension_semantics<parallel>], iteration_bounds = array<i64: 1>, scalar_prefetch = 0 : i64, scratch_operands = 0 : i64, tpu.core_type = #tpu.core_type<tc>, window_params = [{transform_indices = @transform_0, window_bounds = array<i64: 8, 32>}, {pipeline_mode = #tpu.pipeline_mode<synchronous>, transform_indices = @transform_1, window_bounds = array<i64: 32, 128>}, {pipeline_mode = #tpu.pipeline_mode<synchronous>, transform_indices = @transform_2, window_bounds = array<i64: 1, 128>}, {pipeline_mode = #tpu.pipeline_mode<synchronous>, transform_indices = @transform_3, window_bounds = array<i64: 128, 128>}, {pipeline_mode = #tpu.pipeline_mode<synchronous>, transform_indices = @transform_4, window_bounds = array<i64: 1, 128>}, {pipeline_mode = #tpu.pipeline_mode<synchronous>, transform_indices = @transform_5, window_bounds = array<i64: 128, 128>}, {pipeline_mode = #tpu.pipeline_mode<synchronous>, transform_indices = @transform_6, window_bounds = array<i64: 1, 128>}, {pipeline_mode = #tpu.pipeline_mode<synchronous>, transform_indices = @transform_7, window_bounds = array<i64: 1, 128>}, {pipeline_mode = #tpu.pipeline_mode<synchronous>, transform_indices = @transform_8, window_bounds = array<i64: 1, 1>}, {transform_indices = @transform_9, window_bounds = array<i64: 1, 1, 8>}]} {
    %c0 = arith.constant 0 : index
    %c0_0 = arith.constant 0 : index
    %0 = vector.load %arg1[%c0, %c0_0] : memref<8x32xf32, #tpu.memory_space<vmem>>, vector<8x32xf32>
    %1 = arith.truncf %0 : vector<8x32xf32> to vector<8x32xbf16>
    %c0_1 = arith.constant 0 : index
    %c0_2 = arith.constant 0 : index
    %2 = vector.load %arg2[%c0_1, %c0_2] : memref<32x128xbf16, #tpu.memory_space<vmem>>, vector<32x128xbf16>
    %cst = arith.constant dense<0.000000e+00> : vector<8x128xf32>
    %3 = tpu.matmul %1, %2, %cst {dimension_numbers = #tpu.dot_dimension_numbers<[1], [0], [0], [1], [0, 0, 1, 1], [], []>} : vector<8x32xbf16>, vector<32x128xbf16>, vector<8x128xf32> -> vector<8x128xf32>
    %c0_3 = arith.constant 0 : index
    %c0_4 = arith.constant 0 : index
    %4 = vector.load %arg3[%c0_3, %c0_4] : memref<1x128xf32, #tpu.memory_space<vmem>>, vector<1x128xf32>
    %5 = vector.broadcast %4 : vector<1x128xf32> to vector<8x128xf32>
    %6 = arith.addf %3, %5 : vector<8x128xf32>
    %cst_5 = arith.constant 0.000000e+00 : f32
    %7 = vector.broadcast %cst_5 : f32 to vector<8x128xf32>
    %8 = arith.maximumf %6, %7 : vector<8x128xf32>
    %9 = arith.truncf %8 : vector<8x128xf32> to vector<8x128xbf16>
    %c0_6 = arith.constant 0 : index
    %c0_7 = arith.constant 0 : index
    %10 = vector.load %arg4[%c0_6, %c0_7] : memref<128x128xbf16, #tpu.memory_space<vmem>>, vector<128x128xbf16>
    %cst_8 = arith.constant dense<0.000000e+00> : vector<8x128xf32>
    %11 = tpu.matmul %9, %10, %cst_8 {dimension_numbers = #tpu.dot_dimension_numbers<[1], [0], [0], [1], [0, 0, 1, 1], [], []>} : vector<8x128xbf16>, vector<128x128xbf16>, vector<8x128xf32> -> vector<8x128xf32>
    %c0_9 = arith.constant 0 : index
    %c0_10 = arith.constant 0 : index
    %12 = vector.load %arg5[%c0_9, %c0_10] : memref<1x128xf32, #tpu.memory_space<vmem>>, vector<1x128xf32>
    %13 = vector.broadcast %12 : vector<1x128xf32> to vector<8x128xf32>
    %14 = arith.addf %11, %13 : vector<8x128xf32>
    %cst_11 = arith.constant 0.000000e+00 : f32
    %15 = vector.broadcast %cst_11 : f32 to vector<8x128xf32>
    %16 = arith.maximumf %14, %15 : vector<8x128xf32>
    %17 = arith.truncf %16 : vector<8x128xf32> to vector<8x128xbf16>
    %c0_12 = arith.constant 0 : index
    %c0_13 = arith.constant 0 : index
    %18 = vector.load %arg6[%c0_12, %c0_13] : memref<128x128xbf16, #tpu.memory_space<vmem>>, vector<128x128xbf16>
    %cst_14 = arith.constant dense<0.000000e+00> : vector<8x128xf32>
    %19 = tpu.matmul %17, %18, %cst_14 {dimension_numbers = #tpu.dot_dimension_numbers<[1], [0], [0], [1], [0, 0, 1, 1], [], []>} : vector<8x128xbf16>, vector<128x128xbf16>, vector<8x128xf32> -> vector<8x128xf32>
    %c0_15 = arith.constant 0 : index
    %c0_16 = arith.constant 0 : index
    %20 = vector.load %arg7[%c0_15, %c0_16] : memref<1x128xf32, #tpu.memory_space<vmem>>, vector<1x128xf32>
    %21 = vector.broadcast %20 : vector<1x128xf32> to vector<8x128xf32>
    %22 = arith.addf %19, %21 : vector<8x128xf32>
    %cst_17 = arith.constant 0.000000e+00 : f32
    %23 = vector.broadcast %cst_17 : f32 to vector<8x128xf32>
    %24 = arith.maximumf %22, %23 : vector<8x128xf32>
    %25 = arith.truncf %24 : vector<8x128xf32> to vector<8x128xbf16>
    %c0_18 = arith.constant 0 : index
    %c0_19 = arith.constant 0 : index
    %26 = vector.load %arg8[%c0_18, %c0_19] : memref<1x128xbf16, #tpu.memory_space<vmem>>, vector<1x128xbf16>
    %cst_20 = arith.constant dense<0.000000e+00> : vector<1x8xf32>
    %27 = tpu.matmul %26, %25, %cst_20 {dimension_numbers = #tpu.dot_dimension_numbers<[1], [1], [0], [0], [0, 0, 1, 0], [], []>} : vector<1x128xbf16>, vector<8x128xbf16>, vector<1x8xf32> -> vector<1x8xf32>
    %c0_21 = arith.constant 0 : index
    %c0_22 = arith.constant 0 : index
    %28 = vector.load %arg9[%c0_21, %c0_22] : memref<1x1xf32, #tpu.memory_space<vmem>>, vector<1x1xf32>
    %29 = vector.broadcast %28 : vector<1x1xf32> to vector<1x8xf32>
    %30 = arith.addf %27, %29 : vector<1x8xf32>
    %31 = arith.negf %30 : vector<1x8xf32>
    %32 = math.exp %31 : vector<1x8xf32>
    %cst_23 = arith.constant 1.000000e+00 : f32
    %33 = vector.broadcast %cst_23 : f32 to vector<1x8xf32>
    %34 = arith.addf %33, %32 : vector<1x8xf32>
    %35 = arith.divf %33, %34 : vector<1x8xf32>
    %c0_24 = arith.constant 0 : index
    %c0_25 = arith.constant 0 : index
    %c0_26 = arith.constant 0 : index
    %36 = vector.load %arg10[%c0_24, %c0_25, %c0_26] : memref<1x1x8xf32, #tpu.memory_space<vmem>>, vector<1x1x8xf32>
    %37 = vector.shape_cast %36 : vector<1x1x8xf32> to vector<1x8xf32>
    %38 = vector.shape_cast %35 : vector<1x8xf32> to vector<1x1x8xf32>
    tpu.vector_store %arg10[%c0_24, %c0_25, %c0_26], %38 {strides = array<i32>} : memref<1x1x8xf32, #tpu.memory_space<vmem>>, vector<1x1x8xf32>,
    return
  }
  func.func @transform_0(%arg0: i32) -> (i32, i32) {
    %c0_i32 = arith.constant 0 : i32
    %c0_i32_0 = arith.constant 0 : i32
    return %arg0, %c0_i32 : i32, i32
  }
  func.func @transform_1(%arg0: i32) -> (i32, i32) {
    %c0_i32 = arith.constant 0 : i32
    %c0_i32_0 = arith.constant 0 : i32
    %c0_i32_1 = arith.constant 0 : i32
    return %c0_i32, %c0_i32_0 : i32, i32
  }
  func.func @transform_2(%arg0: i32) -> (i32, i32) {
    %c0_i32 = arith.constant 0 : i32
    %c0_i32_0 = arith.constant 0 : i32
    %c0_i32_1 = arith.constant 0 : i32
    return %c0_i32, %c0_i32_0 : i32, i32
  }
  func.func @transform_3(%arg0: i32) -> (i32, i32) {
    %c0_i32 = arith.constant 0 : i32
    %c0_i32_0 = arith.constant 0 : i32
    %c0_i32_1 = arith.constant 0 : i32
    return %c0_i32, %c0_i32_0 : i32, i32
  }
  func.func @transform_4(%arg0: i32) -> (i32, i32) {
    %c0_i32 = arith.constant 0 : i32
    %c0_i32_0 = arith.constant 0 : i32
    %c0_i32_1 = arith.constant 0 : i32
    return %c0_i32, %c0_i32_0 : i32, i32
  }
  func.func @transform_5(%arg0: i32) -> (i32, i32) {
    %c0_i32 = arith.constant 0 : i32
    %c0_i32_0 = arith.constant 0 : i32
    %c0_i32_1 = arith.constant 0 : i32
    return %c0_i32, %c0_i32_0 : i32, i32
  }
  func.func @transform_6(%arg0: i32) -> (i32, i32) {
    %c0_i32 = arith.constant 0 : i32
    %c0_i32_0 = arith.constant 0 : i32
    %c0_i32_1 = arith.constant 0 : i32
    return %c0_i32, %c0_i32_0 : i32, i32
  }
  func.func @transform_7(%arg0: i32) -> (i32, i32) {
    %c0_i32 = arith.constant 0 : i32
    %c0_i32_0 = arith.constant 0 : i32
    %c0_i32_1 = arith.constant 0 : i32
    return %c0_i32, %c0_i32_0 : i32, i32
  }
  func.func @transform_8(%arg0: i32) -> (i32, i32) {
    %c0_i32 = arith.constant 0 : i32
    %c0_i32_0 = arith.constant 0 : i32
    %c0_i32_1 = arith.constant 0 : i32
    return %c0_i32, %c0_i32_0 : i32, i32
  }
  func.func @transform_9(%arg0: i32) -> (i32, i32, i32) {
    %c0_i32 = arith.constant 0 : i32
    %c0_i32_0 = arith.constant 0 : i32
    %c0_i32_1 = arith.constant 0 : i32
    return %arg0, %c0_i32, %c0_i32_0 : i32, i32, i32
  }
}

</mosaic_0001>

<llo_original>
// kernel: custom_model3_forward.1
$region0: #{custom_model3_forward.1}
  #allocation0 [shape = 'u32[]', space=smem, size = 0x4, offset = 0x4, fixed_abs, tag = 'smem constant byte address 0x4 - core index']
  #allocation1 [shape = 'u32[144,128]{1,0:T(1,128)}', space=vmem, size = 0x12000, scoped, tag = 'internal scratch']
  #allocation2 [shape = 'f32[1,1]{1,0:T(1,128)S(1)}', space=vmem, size = 0x200, scoped, tag = 'scoped memory for custom_model3_forward.1']
  %s0 = inlined_call_operand.hbm [shape: f32[8,32], index: 0, kind: input, shape index: {}]
  %s1 = inlined_call_operand.vmem [shape: bf16[32,128], index: 1, kind: input, shape index: {}]
  %s2 = inlined_call_operand.vmem [shape: f32[1,128], index: 2, kind: input, shape index: {}]
  %s3 = inlined_call_operand.hbm [shape: bf16[128,128], index: 3, kind: input, shape index: {}]
  %s4 = inlined_call_operand.vmem [shape: f32[1,128], index: 4, kind: input, shape index: {}]
  %s5 = inlined_call_operand.hbm [shape: bf16[128,128], index: 5, kind: input, shape index: {}]
  %s6 = inlined_call_operand.hbm [shape: f32[1,128], index: 6, kind: input, shape index: {}]
  %s7 = inlined_call_operand.vmem [shape: bf16[1,128], index: 7, kind: input, shape index: {}]
  %s8 = inlined_call_operand.<no memory space> [shape: f32[1,1], index: 8, kind: input, shape index: {}]
  %s9 = inlined_call_operand.hbm [shape: f32[1,1,8], index: 9, kind: output, shape index: {}]
  %s10 = sld [smem:[#allocation0]]
  $region62: #{custom_model3_forward.1} parent=0
    _
  %s12 = ssub.s32 1, %s10
  %s13 = scalar_select 0, %s12, %s10
  %v14 = vstv %s8
  %15 = vst [vmem:[#allocation2] sm:$0x1] %v14
  $region1: #{custom_model3_forward.1} parent=0
    #allocation3 [shape = 'u8[4096]{0}', space=vmem, size = 0x1000, scoped, tag = 'input window, operand 0, single buffered']
    #allocation4 [shape = 's32[1]{0}', space=sflag, size = 0x4, scoped, tag = 'scoped memory for custom_model3_forward.1']
    #allocation5 [shape = 's32[1]{0}', space=sflag, size = 0x4, scoped, tag = 'scoped memory for custom_model3_forward.1']
    #allocation6 [shape = 'u8[32768]{0}', space=vmem, size = 0x8000, scoped, tag = 'input window, operand 3, single buffered']
    #allocation7 [shape = 's32[1]{0}', space=sflag, size = 0x4, scoped, tag = 'scoped memory for custom_model3_forward.1']
    #allocation8 [shape = 'u8[32768]{0}', space=vmem, size = 0x8000, scoped, tag = 'input window, operand 5, single buffered']
    #allocation9 [shape = 'u8[512]{0}', space=vmem, size = 0x400, scoped, tag = 'input window, operand 6, single buffered']
    #allocation10 [shape = 's32[1]{0}', space=sflag, size = 0x4, scoped, tag = 'scoped memory for custom_model3_forward.1']
    #allocation11 [shape = 'u8[512]{0}', space=vmem, size = 0x400, scoped, tag = 'output window, operand 0, single buffered']
    %16 = vsyncpa [#allocation4], 0
    %17 = vsyncpa [#allocation7], 0
    %18 = vsyncpa [#allocation10], 0
    %19 = vsyncpa [#allocation5], 0
    // Predicated region
    $region2: #{custom_model3_forward.1} parent=1 // pred_check
      _
    $region3: #{custom_model3_forward.1} parent=1 // pred_check_branch
      %21 = sbr.rel (0) target = $region5
    $region4: #{custom_model3_forward.1} parent=1 // pred_region
      %s23 = ssub.s32 128, 128
      %24 = vsyncadd [#allocation4], %s23
      %s26 = sshll.u32 [#allocation3], 4
      %s27 = int_to_ptr.vmem [resolvable:$true] %s26
      %29 = dma.hbm_to_vmem [thread:$0]  %s0, 128, %s27, [#allocation4]
    $region5: #{custom_model3_forward.1} parent=1 // pred_fallthru
      _
    // Predicated region
    $region6: #{custom_model3_forward.1} parent=1 // pred_check
      _
    $region7: #{custom_model3_forward.1} parent=1 // pred_check_branch
      %31 = sbr.rel (0) target = $region9
    $region8: #{custom_model3_forward.1} parent=1 // pred_region
      _
    $region9: #{custom_model3_forward.1} parent=1 // pred_fallthru
      _
    // Predicated region
    $region10: #{custom_model3_forward.1} parent=1 // pred_check
      _
    $region11: #{custom_model3_forward.1} parent=1 // pred_check_branch
      %33 = sbr.rel (0) target = $region13
    $region12: #{custom_model3_forward.1} parent=1 // pred_region
      _
    $region13: #{custom_model3_forward.1} parent=1 // pred_fallthru
      _
    // Predicated region
    $region14: #{custom_model3_forward.1} parent=1 // pred_check
      _
    $region15: #{custom_model3_forward.1} parent=1 // pred_check_branch
      %35 = sbr.rel (0) target = $region17
    $region16: #{custom_model3_forward.1} parent=1 // pred_region
      %s37 = ssub.s32 1024, 1024
      %38 = vsyncadd [#allocation7], %s37
      %s39 = sshll.u32 [#allocation6], 4
      %s40 = int_to_ptr.vmem [resolvable:$true] %s39
      %45 = dma.hbm_to_vmem [thread:$0]  %s3, 1024, %s40, [#allocation7], 64, 64, 4
    $region17: #{custom_model3_forward.1} parent=1 // pred_fallthru
      _
    // Predicated region
    $region18: #{custom_model3_forward.1} parent=1 // pred_check
      _
    $region19: #{custom_model3_forward.1} parent=1 // pred_check_branch
      %47 = sbr.rel (0) target = $region21
    $region20: #{custom_model3_forward.1} parent=1 // pred_region
      _
    $region21: #{custom_model3_forward.1} parent=1 // pred_fallthru
      _
    // Predicated region
    $region22: #{custom_model3_forward.1} parent=1 // pred_check
      _
    $region23: #{custom_model3_forward.1} parent=1 // pred_check_branch
      %49 = sbr.rel (0) target = $region25
    $region24: #{custom_model3_forward.1} parent=1 // pred_region
      %s51 = ssub.s32 1024, 1024
      %52 = vsyncadd [#allocation7], %s51
      %s53 = sshll.u32 [#allocation8], 4
      %s54 = int_to_ptr.vmem [resolvable:$true] %s53
      %59 = dma.hbm_to_vmem [thread:$0]  %s5, 1024, %s54, [#allocation7], 64, 64, 4
    $region25: #{custom_model3_forward.1} parent=1 // pred_fallthru
      _
    // Predicated region
    $region26: #{custom_model3_forward.1} parent=1 // pred_check
      _
    $region27: #{custom_model3_forward.1} parent=1 // pred_check_branch
      %61 = sbr.rel (0) target = $region29
    $region28: #{custom_model3_forward.1} parent=1 // pred_region
      %s63 = ssub.s32 16, 16
      %64 = vsyncadd [#allocation10], %s63
      %s66 = sshll.u32 [#allocation9], 4
      %s67 = int_to_ptr.vmem [resolvable:$true] %s66
      %69 = dma.hbm_to_vmem [thread:$0]  %s6, 16, %s67, [#allocation10]
    $region29: #{custom_model3_forward.1} parent=1 // pred_fallthru
      _
    // Predicated region
    $region30: #{custom_model3_forward.1} parent=1 // pred_check
      _
    $region31: #{custom_model3_forward.1} parent=1 // pred_check_branch
      %71 = sbr.rel (0) target = $region33
    $region32: #{custom_model3_forward.1} parent=1 // pred_region
      _
    $region33: #{custom_model3_forward.1} parent=1 // pred_fallthru
      _
    // Predicated region
    $region34: #{custom_model3_forward.1} parent=1 // pred_check
      _
    $region35: #{custom_model3_forward.1} parent=1 // pred_check_branch
      %73 = sbr.rel (0) target = $region37
    $region36: #{custom_model3_forward.1} parent=1 // pred_region
      _
    $region37: #{custom_model3_forward.1} parent=1 // pred_fallthru
      _
    // Predicated region
    $region38: #{custom_model3_forward.1} parent=1 // pred_check
      _
    $region39: #{custom_model3_forward.1} parent=1 // pred_check_branch
      %75 = sbr.rel (0) target = $region41
    $region40: #{custom_model3_forward.1} parent=1 // pred_region
      %76 = dma.done [#allocation4], 128
    $region41: #{custom_model3_forward.1} parent=1 // pred_fallthru
      _
    // Predicated region
    $region42: #{custom_model3_forward.1} parent=1 // pred_check
      _
    $region43: #{custom_model3_forward.1} parent=1 // pred_check_branch
      %78 = sbr.rel (0) target = $region45
    $region44: #{custom_model3_forward.1} parent=1 // pred_region
      %79 = dma.done [#allocation7], 1024
    $region45: #{custom_model3_forward.1} parent=1 // pred_fallthru
      _
    // Predicated region
    $region46: #{custom_model3_forward.1} parent=1 // pred_check
      _
    $region47: #{custom_model3_forward.1} parent=1 // pred_check_branch
      %81 = sbr.rel (0) target = $region49
    $region48: #{custom_model3_forward.1} parent=1 // pred_region
      %82 = dma.done [#allocation7], 1024
    $region49: #{custom_model3_forward.1} parent=1 // pred_fallthru
      _
    // Predicated region
    $region50: #{custom_model3_forward.1} parent=1 // pred_check
      _
    $region51: #{custom_model3_forward.1} parent=1 // pred_check_branch
      %84 = sbr.rel (0) target = $region53
    $region52: #{custom_model3_forward.1} parent=1 // pred_region
      %85 = dma.done [#allocation10], 16
    $region53: #{custom_model3_forward.1} parent=1 // pred_fallthru
      _
    %v87 = vld [vmem:[#allocation3] sm:$0xff]
    %v88 = vpack.c.bf16 %v87, %v87
    %v89 = vld [vmem:[%s1] sm:$0xf]
    %v90 = vld [vmem:[%s1 + $0x4] sm:$0xf]
    %v91 = vld [vmem:[%s1 + $0x8] sm:$0xf]
    %v92 = vld [vmem:[%s1 + $0xc] sm:$0xf]
    %v93 = vld [vmem:[%s2] sm:$0x1]
    %v95 = vlaneseq
    %v96 = vshrl.u32 %v95, 7
    %v97 = vsub.s32 0, %v96
    %v98 = vrot.slane %v93, %v97
    %v104 = vunpack.c.l.b16 %v89
    %v105 = vunpack.c.l.b16 %v90
    %v106 = vunpack.c.l.b16 %v91
    %v107 = vunpack.c.l.b16 %v92
    %v108 = vpack.c.b16 %v105, %v104
    %v109 = vpack.c.b16 %v107, %v106
    %vm112 = vcmask 261120
    %v114 = vsel %vm112, %v88, 0
    %116 = vmatprep.subr.bf16.mxu0 0
    %117 = vmatpush1.bf16.msra.mxu0 %v108
    %118 = vmatprep.subr.bf16.mxu0 0
    %119 = vmatpush1.bf16.msra.mxu0 %v109
    %120 = vmatprep.subr.bf16.mxu0 0
    %121 = vmatpush1.bf16.msra.mxu0 0
    %122 = vmatprep.subr.bf16.mxu0 0
    %123 = vmatpush1.bf16.msra.mxu0 0
    %124 = vmatprep.subr.bf16.mxu0 0
    %125 = vmatpush1.bf16.msra.mxu0 0
    %126 = vmatprep.subr.bf16.mxu0 0
    %127 = vmatpush1.bf16.msra.mxu0 0
    %128 = vmatprep.subr.bf16.mxu0 0
    %129 = vmatpush1.bf16.msra.mxu0 0
    %130 = vmatprep.subr.bf16.mxu0 0
    %131 = vmatpush1.bf16.msra.mxu0 0
    %132 = vmatprep.subr.bf16.mxu0 0
    %133 = vmatpush1.bf16.msra.mxu0 0
    %134 = vmatprep.subr.bf16.mxu0 0
    %135 = vmatpush1.bf16.msra.mxu0 0
    %136 = vmatprep.subr.bf16.mxu0 0
    %137 = vmatpush1.bf16.msra.mxu0 0
    %138 = vmatprep.subr.bf16.mxu0 0
    %139 = vmatpush1.bf16.msra.mxu0 0
    %140 = vmatprep.subr.bf16.mxu0 0
    %141 = vmatpush1.bf16.msra.mxu0 0
    %142 = vmatprep.subr.bf16.mxu0 0
    %143 = vmatpush1.bf16.msra.mxu0 0
    %144 = vmatprep.subr.bf16.mxu0 0
    %145 = vmatpush1.bf16.msra.mxu0 0
    %146 = vmatprep.subr.bf16.mxu0 0
    %147 = vmatpush1.bf16.msra.mxu0 0
    %148 = vmatprep.mubr.bf16.mxu0 0
    %149 = vmatmul.mubr.bf16.gmra.mrb[0].mxu0 %v114
    %v150 = vpop.f32.mrb[0].mxu0
    %v151 = vadd.f32 %v98, %v150
    %v152 = vpop.f32.mrb[0].mxu0
    %v153 = vpop.f32.mrb[0].mxu0
    %v154 = vpop.f32.mrb[0].mxu0
    %155 = vdwg.mxu0
    %v156 = vmax.f32 %v151, 0.0
    %v157 = vpack.c.bf16 %v156, %v156
    %v158 = vld [vmem:[#allocation6] sm:$0xf]
    %v159 = vld [vmem:[#allocation6 + $0x4] sm:$0xf]
    %v160 = vld [vmem:[#allocation6 + $0x8] sm:$0xf]
    %v161 = vld [vmem:[#allocation6 + $0xc] sm:$0xf]
    %v162 = vld [vmem:[#allocation6 + $0x10] sm:$0xf]
    %v163 = vld [vmem:[#allocation6 + $0x14] sm:$0xf]
    %v164 = vld [vmem:[#allocation6 + $0x18] sm:$0xf]
    %v165 = vld [vmem:[#allocation6 + $0x1c] sm:$0xf]
    %v166 = vld [vmem:[#allocation6 + $0x20] sm:$0xf]
    %v167 = vld [vmem:[#allocation6 + $0x24] sm:$0xf]
    %v168 = vld [vmem:[#allocation6 + $0x28] sm:$0xf]
    %v169 = vld [vmem:[#allocation6 + $0x2c] sm:$0xf]
    %v170 = vld [vmem:[#allocation6 + $0x30] sm:$0xf]
    %v171 = vld [vmem:[#allocation6 + $0x34] sm:$0xf]
    %v172 = vld [vmem:[#allocation6 + $0x38] sm:$0xf]
    %v173 = vld [vmem:[#allocation6 + $0x3c] sm:$0xf]
    %v174 = vld [vmem:[%s4] sm:$0x1]
    %v176 = vlaneseq
    %v177 = vshrl.u32 %v176, 7
    %v178 = vsub.s32 0, %v177
    %v179 = vrot.slane %v174, %v178
    %v197 = vunpack.c.l.b16 %v158
    %v198 = vunpack.c.l.b16 %v159
    %v199 = vunpack.c.l.b16 %v160
    %v200 = vunpack.c.l.b16 %v161
    %v201 = vunpack.c.l.b16 %v162
    %v202 = vunpack.c.l.b16 %v163
    %v203 = vunpack.c.l.b16 %v164
    %v204 = vunpack.c.l.b16 %v165
    %v205 = vunpack.c.l.b16 %v166
    %v206 = vunpack.c.l.b16 %v167
    %v207 = vunpack.c.l.b16 %v168
    %v208 = vunpack.c.l.b16 %v169
    %v209 = vunpack.c.l.b16 %v170
    %v210 = vunpack.c.l.b16 %v171
    %v211 = vunpack.c.l.b16 %v172
    %v212 = vunpack.c.l.b16 %v173
    %v213 = vpack.c.b16 %v198, %v197
    %v214 = vpack.c.b16 %v200, %v199
    %v215 = vpack.c.b16 %v202, %v201
    %v216 = vpack.c.b16 %v204, %v203
    %v217 = vpack.c.b16 %v206, %v205
    %v218 = vpack.c.b16 %v208, %v207
    %v219 = vpack.c.b16 %v210, %v209
    %v220 = vpack.c.b16 %v212, %v211
    %229 = vmatprep.subr.bf16.mxu0 0
    %230 = vmatpush1.bf16.msra.mxu0 %v213
    %231 = vmatprep.subr.bf16.mxu0 0
    %232 = vmatpush1.bf16.msra.mxu0 %v214
    %233 = vmatprep.subr.bf16.mxu0 0
    %234 = vmatpush1.bf16.msra.mxu0 %v215
    %235 = vmatprep.subr.bf16.mxu0 0
    %236 = vmatpush1.bf16.msra.mxu0 %v216
    %237 = vmatprep.subr.bf16.mxu0 0
    %238 = vmatpush1.bf16.msra.mxu0 %v217
    %239 = vmatprep.subr.bf16.mxu0 0
    %240 = vmatpush1.bf16.msra.mxu0 %v218
    %241 = vmatprep.subr.bf16.mxu0 0
    %242 = vmatpush1.bf16.msra.mxu0 %v219
    %243 = vmatprep.subr.bf16.mxu0 0
    %244 = vmatpush1.bf16.msra.mxu0 %v220
    %245 = vmatprep.subr.bf16.mxu0 0
    %246 = vmatpush1.bf16.msra.mxu0 0
    %247 = vmatprep.subr.bf16.mxu0 0
    %248 = vmatpush1.bf16.msra.mxu0 0
    %249 = vmatprep.subr.bf16.mxu0 0
    %250 = vmatpush1.bf16.msra.mxu0 0
    %251 = vmatprep.subr.bf16.mxu0 0
    %252 = vmatpush1.bf16.msra.mxu0 0
    %253 = vmatprep.subr.bf16.mxu0 0
    %254 = vmatpush1.bf16.msra.mxu0 0
    %255 = vmatprep.subr.bf16.mxu0 0
    %256 = vmatpush1.bf16.msra.mxu0 0
    %257 = vmatprep.subr.bf16.mxu0 0
    %258 = vmatpush1.bf16.msra.mxu0 0
    %259 = vmatprep.subr.bf16.mxu0 0
    %260 = vmatpush1.bf16.msra.mxu0 0
    %261 = vmatprep.mubr.bf16.mxu0 0
    %262 = vmatmul.mubr.bf16.gmra.mrb[0].mxu0 %v157
    %v263 = vpop.f32.mrb[0].mxu0
    %v264 = vadd.f32 %v179, %v263
    %v265 = vpop.f32.mrb[0].mxu0
    %v266 = vpop.f32.mrb[0].mxu0
    %v267 = vpop.f32.mrb[0].mxu0
    %268 = vdwg.mxu0
    %v269 = vmax.f32 %v264, 0.0
    %v270 = vpack.c.bf16 %v269, %v269
    %v271 = vld [vmem:[#allocation8] sm:$0xf]
    %v272 = vld [vmem:[#allocation8 + $0x4] sm:$0xf]
    %v273 = vld [vmem:[#allocation8 + $0x8] sm:$0xf]
    %v274 = vld [vmem:[#allocation8 + $0xc] sm:$0xf]
    %v275 = vld [vmem:[#allocation8 + $0x10] sm:$0xf]
    %v276 = vld [vmem:[#allocation8 + $0x14] sm:$0xf]
    %v277 = vld [vmem:[#allocation8 + $0x18] sm:$0xf]
    %v278 = vld [vmem:[#allocation8 + $0x1c] sm:$0xf]
    %v279 = vld [vmem:[#allocation8 + $0x20] sm:$0xf]
    %v280 = vld [vmem:[#allocation8 + $0x24] sm:$0xf]
    %v281 = vld [vmem:[#allocation8 + $0x28] sm:$0xf]
    %v282 = vld [vmem:[#allocation8 + $0x2c] sm:$0xf]
    %v283 = vld [vmem:[#allocation8 + $0x30] sm:$0xf]
    %v284 = vld [vmem:[#allocation8 + $0x34] sm:$0xf]
    %v285 = vld [vmem:[#allocation8 + $0x38] sm:$0xf]
    %v286 = vld [vmem:[#allocation8 + $0x3c] sm:$0xf]
    %v287 = vld [vmem:[#allocation9] sm:$0x1]
    %v289 = vlaneseq
    %v290 = vshrl.u32 %v289, 7
    %v291 = vsub.s32 0, %v290
    %v292 = vrot.slane %v287, %v291
    %v310 = vunpack.c.l.b16 %v271
    %v311 = vunpack.c.l.b16 %v272
    %v312 = vunpack.c.l.b16 %v273
    %v313 = vunpack.c.l.b16 %v274
    %v314 = vunpack.c.l.b16 %v275
    %v315 = vunpack.c.l.b16 %v276
    %v316 = vunpack.c.l.b16 %v277
    %v317 = vunpack.c.l.b16 %v278
    %v318 = vunpack.c.l.b16 %v279
    %v319 = vunpack.c.l.b16 %v280
    %v320 = vunpack.c.l.b16 %v281
    %v321 = vunpack.c.l.b16 %v282
    %v322 = vunpack.c.l.b16 %v283
    %v323 = vunpack.c.l.b16 %v284
    %v324 = vunpack.c.l.b16 %v285
    %v325 = vunpack.c.l.b16 %v286
    %v326 = vpack.c.b16 %v311, %v310
    %v327 = vpack.c.b16 %v313, %v312
    %v328 = vpack.c.b16 %v315, %v314
    %v329 = vpack.c.b16 %v317, %v316
    %v330 = vpack.c.b16 %v319, %v318
    %v331 = vpack.c.b16 %v321, %v320
    %v332 = vpack.c.b16 %v323, %v322
    %v333 = vpack.c.b16 %v325, %v324
    %342 = vmatprep.subr.bf16.mxu0 0
    %343 = vmatpush1.bf16.msra.mxu0 %v326
    %344 = vmatprep.subr.bf16.mxu0 0
    %345 = vmatpush1.bf16.msra.mxu0 %v327
    %346 = vmatprep.subr.bf16.mxu0 0
    %347 = vmatpush1.bf16.msra.mxu0 %v328
    %348 = vmatprep.subr.bf16.mxu0 0
    %349 = vmatpush1.bf16.msra.mxu0 %v329
    %350 = vmatprep.subr.bf16.mxu0 0
    %351 = vmatpush1.bf16.msra.mxu0 %v330
    %352 = vmatprep.subr.bf16.mxu0 0
    %353 = vmatpush1.bf16.msra.mxu0 %v331
    %354 = vmatprep.subr.bf16.mxu0 0
    %355 = vmatpush1.bf16.msra.mxu0 %v332
    %356 = vmatprep.subr.bf16.mxu0 0
    %357 = vmatpush1.bf16.msra.mxu0 %v333
    %358 = vmatprep.subr.bf16.mxu0 0
    %359 = vmatpush1.bf16.msra.mxu0 0
    %360 = vmatprep.subr.bf16.mxu0 0
    %361 = vmatpush1.bf16.msra.mxu0 0
    %362 = vmatprep.subr.bf16.mxu0 0
    %363 = vmatpush1.bf16.msra.mxu0 0
    %364 = vmatprep.subr.bf16.mxu0 0
    %365 = vmatpush1.bf16.msra.mxu0 0
    %366 = vmatprep.subr.bf16.mxu0 0
    %367 = vmatpush1.bf16.msra.mxu0 0
    %368 = vmatprep.subr.bf16.mxu0 0
    %369 = vmatpush1.bf16.msra.mxu0 0
    %370 = vmatprep.subr.bf16.mxu0 0
    %371 = vmatpush1.bf16.msra.mxu0 0
    %372 = vmatprep.subr.bf16.mxu0 0
    %373 = vmatpush1.bf16.msra.mxu0 0
    %374 = vmatprep.mubr.bf16.mxu0 0
    %375 = vmatmul.mubr.bf16.gmra.mrb[0].mxu0 %v270
    %v376 = vpop.f32.mrb[0].mxu0
    %v377 = vadd.f32 %v292, %v376
    %v378 = vpop.f32.mrb[0].mxu0
    %v379 = vpop.f32.mrb[0].mxu0
    %v380 = vpop.f32.mrb[0].mxu0
    %381 = vdwg.mxu0
    %v382 = vmax.f32 %v377, 0.0
    %v383 = vpack.c.bf16 %v382, %v382
    %v384 = vld [vmem:[%s7] sm:$0x1]
    %v385 = vld [vmem:[#allocation2] sm:$0x1]
    %387 = vset.pattern.permute.xlu0 0
    %388 = vperm.xlu0 %387, %v385
    %v389 = vpop.permute.xlu0 %388
    %v391 = vlaneseq
    %v392 = vshrl.u32 %v391, 7
    %v393 = vsub.s32 0, %v392
    %v394 = vrot.slane %v389, %v393
    %395 = vmatprep.subr.bf16.mxu0 0
    %396 = vmatpush1.bf16.xpose.msra.mxu0 %v383
    %397 = vmatprep.subr.bf16.mxu0 0
    %398 = vmatpush1.bf16.xpose.msra.mxu0 0
    %399 = vmatprep.subr.bf16.mxu0 0
    %400 = vmatpush1.bf16.xpose.msra.mxu0 0
    %401 = vmatprep.subr.bf16.mxu0 0
    %402 = vmatpush1.bf16.xpose.msra.mxu0 0
    %403 = vmatprep.subr.bf16.mxu0 0
    %404 = vmatpush1.bf16.xpose.msra.mxu0 0
    %405 = vmatprep.subr.bf16.mxu0 0
    %406 = vmatpush1.bf16.xpose.msra.mxu0 0
    %407 = vmatprep.subr.bf16.mxu0 0
    %408 = vmatpush1.bf16.xpose.msra.mxu0 0
    %409 = vmatprep.subr.bf16.mxu0 0
    %410 = vmatpush1.bf16.xpose.msra.mxu0 0
    %411 = vmatprep.subr.bf16.mxu0 0
    %412 = vmatpush1.bf16.xpose.msra.mxu0 0
    %413 = vmatprep.subr.bf16.mxu0 0
    %414 = vmatpush1.bf16.xpose.msra.mxu0 0
    %415 = vmatprep.subr.bf16.mxu0 0
    %416 = vmatpush1.bf16.xpose.msra.mxu0 0
    %417 = vmatprep.subr.bf16.mxu0 0
    %418 = vmatpush1.bf16.xpose.msra.mxu0 0
    %419 = vmatprep.subr.bf16.mxu0 0
    %420 = vmatpush1.bf16.xpose.msra.mxu0 0
    %421 = vmatprep.subr.bf16.mxu0 0
    %422 = vmatpush1.bf16.xpose.msra.mxu0 0
    %423 = vmatprep.subr.bf16.mxu0 0
    %424 = vmatpush1.bf16.xpose.msra.mxu0 0
    %425 = vmatprep.subr.bf16.mxu0 0
    %426 = vmatpush1.bf16.xpose.msra.mxu0 0
    %427 = vmatprep.mubr.bf16.mxu0 0
    %428 = vmatmul.mubr.bf16.gmra.mrb[0].mxu0 %v384
    %v429 = vpop.f32.mrb[0].mxu0
    %v430 = vadd.f32 %v394, %v429
    %v431 = vpop.f32.mrb[0].mxu0
    %v432 = vpop.f32.mrb[0].mxu0
    %v433 = vpop.f32.mrb[0].mxu0
    %434 = vdwg.mxu0
    %v435 = vxor.u32 %v430, 2147483648
    %v436 = vmul.f32 %v435, 1.442695
    %v437 = vpow.pop %v436
    %v438 = vadd.f32 %v437, 1.0
    %v439 = vrcp.pop %v438
    %v440 = vmul.f32 1.0, %v439
    %vm441 = vcmask 57344
    %442 = vst.msk [vmem:[#allocation11] sm:$0x1] %vm441, %v440
    // Predicated region
    $region54: #{custom_model3_forward.1} parent=1 // pred_check
      _
    $region55: #{custom_model3_forward.1} parent=1 // pred_check_branch
      %444 = sbr.rel (0) target = $region57
    $region56: #{custom_model3_forward.1} parent=1 // pred_region
      %s446 = ssub.s32 16, 16
      %447 = vsyncadd [#allocation5], %s446
      %s449 = sshll.u32 [#allocation11], 4
      %s450 = int_to_ptr.vmem [resolvable:$true] %s449
      %452 = dma.vmem_to_hbm [thread:$0]  %s450, 16, %s9, [#allocation5]
    $region57: #{custom_model3_forward.1} parent=1 // pred_fallthru
      _
    // Predicated region
    $region58: #{custom_model3_forward.1} parent=1 // pred_check
      _
    $region59: #{custom_model3_forward.1} parent=1 // pred_check_branch
      %454 = sbr.rel (0) target = $region61
    $region60: #{custom_model3_forward.1} parent=1 // pred_region
      %455 = dma.done [#allocation5], 16
    $region61: #{custom_model3_forward.1} parent=1 // pred_fallthru
      _
    %456 = vsyncpa [#allocation4], 1
    %457 = vsyncpa [#allocation7], 1
    %458 = vsyncpa [#allocation10], 1
    %459 = vsyncpa [#allocation5], 1

</llo_original>
